<compile_context>
chip_gen: v7x
topology: tpu7x:2x2x1
jax: 0.10.0
libtpu: 0.0.40
codegen_flags: <defaults>
</compile_context>

<pallas_src>
import functools
import math

import jax
import jax.numpy as jnp
from jax.experimental import pallas as pl
from jax.experimental.pallas import tpu as pltpu

PADDING_TOKEN = 0
LN_EPS = 1e-5          # nn.LayerNorm default
NEG_INF = -1e30        # additive mask value (finite -> no NaN risk)


# ---------------------------------------------------------------------------
# Parameter / buffer construction (plain JAX glue, not the hot path).
# ---------------------------------------------------------------------------
def make_positional_encoding(d_model: int, max_len: int) -> jnp.ndarray:
    """Sinusoidal positional-encoding table [max_len, d_model] (as in the module)."""
    position = jnp.arange(max_len, dtype=jnp.float32)[:, None]
    div_term = jnp.exp(jnp.arange(0, d_model, 2, dtype=jnp.float32)
                       * (-math.log(10000.0) / d_model))
    pe = jnp.zeros((max_len, d_model), dtype=jnp.float32)
    pe = pe.at[:, 0::2].set(jnp.sin(position * div_term))
    pe = pe.at[:, 1::2].set(jnp.cos(position * div_term))
    return pe


def init_params(key, vocab, d_model, num_layers, dim_ff, max_len):
    keys = iter(jax.random.split(key, 8 + num_layers * 24))

    def dense(fan_in, fan_out):
        lim = 1.0 / math.sqrt(fan_in)
        return jax.random.uniform(next(keys), (fan_in, fan_out),
                                  jnp.float32, -lim, lim)

    def bias(fan_in, n):
        lim = 1.0 / math.sqrt(fan_in)
        return jax.random.uniform(next(keys), (1, n), jnp.float32, -lim, lim)

    def attn_block():
        return dict(wq=dense(d_model, d_model), wk=dense(d_model, d_model),
                    wv=dense(d_model, d_model), wo=dense(d_model, d_model),
                    bq=bias(d_model, d_model), bk=bias(d_model, d_model),
                    bv=bias(d_model, d_model), bo=bias(d_model, d_model),
                    g=jnp.ones((1, d_model), jnp.float32),
                    b=jnp.zeros((1, d_model), jnp.float32))

    emb = jax.random.normal(next(keys), (vocab, d_model), jnp.float32)
    emb = emb.at[PADDING_TOKEN].set(0.0)       # padding_idx row is zeros

    layers = []
    for _ in range(num_layers):
        layers.append(dict(
            self_attn=attn_block(),
            cross_attn=attn_block(),
            ffn=dict(w1=dense(d_model, dim_ff), b1=bias(d_model, dim_ff),
                     w2=dense(dim_ff, d_model), b2=bias(dim_ff, d_model),
                     g=jnp.ones((1, d_model), jnp.float32),
                     b=jnp.zeros((1, d_model), jnp.float32)),
        ))

    return dict(
        embedding=emb,
        pe=make_positional_encoding(d_model, max_len),
        layers=layers,
        final_norm=dict(g=jnp.ones((1, d_model), jnp.float32),
                        b=jnp.zeros((1, d_model), jnp.float32)),
        out_proj=dict(w=dense(d_model, vocab), b=bias(d_model, vocab)),
    )


# ---------------------------------------------------------------------------
# In-kernel helpers
# ---------------------------------------------------------------------------
def _layernorm(y, g, b, eps):
    mu = jnp.mean(y, axis=-1, keepdims=True)
    var = jnp.mean(jnp.square(y - mu), axis=-1, keepdims=True)
    return (y - mu) * jax.lax.rsqrt(var + eps) * g + b


def _attention(xq, xkv, bias, wq, wk, wv, wo, bq, bk, bv, bo, g, beta,
               *, num_heads, eps):
    """Multi-head attention + residual + post-LayerNorm (one batch element)."""
    d_model = xq.shape[-1]
    head_dim = d_model // num_heads
    scale = 1.0 / math.sqrt(head_dim)

    q = jnp.dot(xq, wq, preferred_element_type=jnp.float32) + bq
    k = jnp.dot(xkv, wk, preferred_element_type=jnp.float32) + bk
    v = jnp.dot(xkv, wv, preferred_element_type=jnp.float32) + bv

    attn = jnp.zeros_like(xq)
    for h in range(num_heads):              # static unroll over heads
        sl = slice(h * head_dim, (h + 1) * head_dim)
        s = jax.lax.dot_general(q[:, sl], k[:, sl], (((1,), (1,)), ((), ())),
                                preferred_element_type=jnp.float32) * scale
        if bias is not None:
            s = s + bias
        s = s - jnp.max(s, axis=-1, keepdims=True)
        p = jnp.exp(s)
        p = p / jnp.sum(p, axis=-1, keepdims=True)
        ctx = jnp.dot(p, v[:, sl], preferred_element_type=jnp.float32)
        attn = attn + jnp.dot(ctx, wo[sl, :], preferred_element_type=jnp.float32)
    attn = attn + bo

    # residual (dropout = identity in eval) + LayerNorm
    return _layernorm(xq + attn, g, beta, eps)


# ---------------------------------------------------------------------------
# Kernels
# ---------------------------------------------------------------------------
def _embed_pe_kernel(tok_ref, emb_ref, pe_ref, o_ref):
    """Embedding lookup via one-hot matmul (MXU) fused with positional-encoding add."""
    ids = tok_ref[...]                                     # [R, 1] int32
    rows, _ = ids.shape
    vocab = emb_ref.shape[0]
    onehot = (jax.lax.broadcasted_iota(jnp.int32, (rows, vocab), 1)
              == ids).astype(jnp.float32)
    x = jnp.dot(onehot, emb_ref[...], preferred_element_type=jnp.float32)
    o_ref[...] = x + pe_ref[...]


def _decoder_layer_kernel(x_ref, mem_ref, kpad_ref,
                          swq, swk, swv, swo, sbq, sbk, sbv, sbo, sg, sb,
                          cwq, cwk, cwv, cwo, cbq, cbk, cbv, cbo, cg, cb,
                          w1, b1, w2, b2, fg, fb,
                          o_ref, *, num_heads, eps):
    """One full nn.TransformerDecoderLayer (post-norm) for one batch element."""
    x = x_ref[...]                          # [S, D]
    mem = mem_ref[...]                      # [Sm, D]
    seq = x.shape[0]

    # tgt_mask (strict causal, True = masked) built in-kernel, plus key-pad bias.
    rows = jax.lax.broadcasted_iota(jnp.int32, (seq, seq), 0)
    cols = jax.lax.broadcasted_iota(jnp.int32, (seq, seq), 1)
    self_bias = jnp.where(cols > rows, NEG_INF, 0.0) + kpad_ref[...]   # [S, S]

    # self-attention block
    x = _attention(x, x, self_bias,
                   swq[...], swk[...], swv[...], swo[...],
                   sbq[...], sbk[...], sbv[...], sbo[...],
                   sg[...], sb[...], num_heads=num_heads, eps=eps)

    # cross-attention block (no memory mask in the reference module)
    x = _attention(x, mem, None,
                   cwq[...], cwk[...], cwv[...], cwo[...],
                   cbq[...], cbk[...], cbv[...], cbo[...],
                   cg[...], cb[...], num_heads=num_heads, eps=eps)

    # feed-forward block: Linear -> ReLU -> Linear + residual + LayerNorm
    h = jnp.dot(x, w1[...], preferred_element_type=jnp.float32) + b1[...]
    h = jnp.maximum(h, 0.0)
    y = x + jnp.dot(h, w2[...], preferred_element_type=jnp.float32) + b2[...]
    o_ref[...] = _layernorm(y, fg[...], fb[...], eps).astype(o_ref.dtype)


def _ln_linear_kernel(x_ref, g_ref, beta_ref, w_ref, b_ref, o_ref, *, eps):
    """Final decoder LayerNorm fused with the output Linear projection."""
    x = _layernorm(x_ref[...], g_ref[...], beta_ref[...], eps)
    o_ref[...] = (jnp.dot(x, w_ref[...], preferred_element_type=jnp.float32)
                  + b_ref[...]).astype(o_ref.dtype)


# ---------------------------------------------------------------------------
# pallas_call wrappers
# ---------------------------------------------------------------------------
def _embed_positional(tokens_2d, emb_table, pe_rows):
    rows = tokens_2d.shape[0]
    d_model = emb_table.shape[1]
    return pl.pallas_call(
        _embed_pe_kernel,
        out_shape=jax.ShapeDtypeStruct((rows, d_model), jnp.float32),
    )(tokens_2d, emb_table, pe_rows)


def _decoder_layer(x, memory, kpad, layer, num_heads):
    batch, seq, d_model = x.shape
    mem_seq = memory.shape[1]
    dim_ff = layer["ffn"]["w1"].shape[1]
    kernel = functools.partial(_decoder_layer_kernel,
                               num_heads=num_heads, eps=LN_EPS)

    def full(shape):
        return pl.BlockSpec(shape, lambda b, _n=len(shape): (0,) * _n)

    def per_batch(*dims):
        return pl.BlockSpec((None,) + dims,
                            lambda b, _n=len(dims): (b,) + (0,) * _n)

    sa, ca, ff = layer["self_attn"], layer["cross_attn"], layer["ffn"]
    attn_specs = ([full((d_model, d_model))] * 4        # wq wk wv wo
                  + [full((1, d_model))] * 4            # bq bk bv bo
                  + [full((1, d_model))] * 2)           # ln gamma / beta
    in_specs = (
        [per_batch(seq, d_model),                       # x
         per_batch(mem_seq, d_model),                   # memory
         per_batch(1, seq)]                             # key-pad additive bias
        + attn_specs + attn_specs
        + [full((d_model, dim_ff)), full((1, dim_ff)),  # ffn w1 b1
           full((dim_ff, d_model)), full((1, d_model)), # ffn w2 b2
           full((1, d_model)), full((1, d_model))])     # ffn ln gamma / beta

    flops = batch * (8 * seq * d_model * d_model
                     + 4 * seq * seq * d_model
                     + 4 * (seq + mem_seq) * d_model * d_model
                     + 4 * seq * mem_seq * d_model
                     + 4 * seq * d_model * dim_ff)
    bytes_accessed = 4 * (2 * batch * seq * d_model
                          + batch * mem_seq * d_model
                          + batch * seq
                          + 8 * d_model * d_model
                          + 2 * d_model * dim_ff
                          + 14 * d_model + 2 * dim_ff)

    return pl.pallas_call(
        kernel,
        out_shape=jax.ShapeDtypeStruct((batch, seq, d_model), jnp.float32),
        grid=(batch,),
        in_specs=in_specs,
        out_specs=per_batch(seq, d_model),
        compiler_params=pltpu.CompilerParams(
            dimension_semantics=("parallel",)),          # batch rows independent
        cost_estimate=pl.CostEstimate(
            flops=int(flops),
            transcendentals=int(batch * num_heads * (seq * seq + seq * mem_seq)),
            bytes_accessed=int(bytes_accessed)),
    )(x, memory, kpad,
      sa["wq"], sa["wk"], sa["wv"], sa["wo"],
      sa["bq"], sa["bk"], sa["bv"], sa["bo"], sa["g"], sa["b"],
      ca["wq"], ca["wk"], ca["wv"], ca["wo"],
      ca["bq"], ca["bk"], ca["bv"], ca["bo"], ca["g"], ca["b"],
      ff["w1"], ff["b1"], ff["w2"], ff["b2"], ff["g"], ff["b"])


def _ln_linear(x2d, norm_p, proj_p):
    rows = x2d.shape[0]
    vocab = proj_p["w"].shape[1]
    kernel = functools.partial(_ln_linear_kernel, eps=LN_EPS)
    return pl.pallas_call(
        kernel,
        out_shape=jax.ShapeDtypeStruct((rows, vocab), jnp.float32),
    )(x2d, norm_p["g"], norm_p["b"], proj_p["w"], proj_p["b"])


# ---------------------------------------------------------------------------
# Full decoder forward (eval mode)
# ---------------------------------------------------------------------------
def transformer_decoder_forward(tgt, memory, mask_out, params, num_heads):
    batch, seq = tgt.shape
    d_model = params["embedding"].shape[1]

    # Embedding lookup + positional encoding, flattened to [B*S, D].
    pe_rows = jnp.tile(params["pe"][:seq, :], (batch, 1))        # [B*S, D]
    tok2d = tgt.reshape(batch * seq, 1).astype(jnp.int32)
    x = _embed_positional(tok2d, params["embedding"], pe_rows)
    x = x.reshape(batch, seq, d_model)

    # tgt_key_padding_mask -> additive per-key bias row; causal mask is built
    # inside the layer kernel.
    kpad = jnp.where(mask_out, NEG_INF, 0.0).astype(jnp.float32)
    kpad = kpad.reshape(batch, 1, seq)

    memory = memory.astype(jnp.float32)
    for layer in params["layers"]:
        x = _decoder_layer(x, memory, kpad, layer, num_heads)

    logits = _ln_linear(x.reshape(batch * seq, d_model),
                        params["final_norm"], params["out_proj"])
    return logits.reshape(batch, seq, -1)


# ---------------------------------------------------------------------------
# Pure-JAX reference (same math, no Pallas) for correctness checking
# ---------------------------------------------------------------------------
def _ref_layernorm(x, g, b, eps=LN_EPS):
    mu = x.mean(-1, keepdims=True)
    var = ((x - mu) ** 2).mean(-1, keepdims=True)
    return (x - mu) * jax.lax.rsqrt(var + eps) * g[0] + b[0]


def _ref_mha(xq, xkv, mask, p, num_heads):
    batch, sq, d_model = xq.shape
    hd = d_model // num_heads
    q = (xq @ p["wq"] + p["bq"][0]).reshape(batch, sq, num_heads, hd)
    k = (xkv @ p["wk"] + p["bk"][0]).reshape(batch, -1, num_heads, hd)
    v = (xkv @ p["wv"] + p["bv"][0]).reshape(batch, -1, num_heads, hd)
    s = jnp.einsum("bqhd,bkhd->bhqk", q, k) / math.sqrt(hd) + mask[:, None]
    a = jax.nn.softmax(s, axis=-1)
    ctx = jnp.einsum("bhqk,bkhd->bqhd", a, v).reshape(batch, sq, d_model)
    return _ref_layernorm(xq + ctx @ p["wo"] + p["bo"][0], p["g"], p["b"])


def _ref_forward(tgt, memory, mask_out, params, num_heads):
    batch, seq = tgt.shape
    x = params["embedding"][tgt] + params["pe"][:seq][None]
    causal = jnp.triu(jnp.ones((seq, seq), dtype=bool), k=1)
    self_mask = jnp.where(causal[None] | mask_out[:, None, :],
                          NEG_INF, 0.0).astype(jnp.float32)
    cross_mask = jnp.zeros((batch, seq, memory.shape[1]), jnp.float32)
    for layer in params["layers"]:
        x = _ref_mha(x, x, self_mask, layer["self_attn"], num_heads)
        x = _ref_mha(x, memory, cross_mask, layer["cross_attn"], num_heads)
        f = layer["ffn"]
        h = jnp.maximum(x @ f["w1"] + f["b1"][0], 0.0)
        x = _ref_layernorm(x + h @ f["w2"] + f["b2"][0], f["g"], f["b"])
    x = _ref_layernorm(x, params["final_norm"]["g"], params["final_norm"]["b"])
    return x @ params["out_proj"]["w"] + params["out_proj"]["b"][0]


# ---------------------------------------------------------------------------
if __name__ == "__main__":
    BATCH, SEQ, MEM_SEQ = 2, 8, 8
    VOCAB, D_MODEL, N_LAYERS, N_HEADS = 32, 32, 2, 4
    DIM_FF, MAX_LEN = 2048, 64   # nn.TransformerDecoderLayer default dim_feedforward

    root = jax.random.PRNGKey(0)
    k_par, k_tok, k_mem = jax.random.split(root, 3)

    params = init_params(k_par, VOCAB, D_MODEL, N_LAYERS, DIM_FF, MAX_LEN)

    mask_out = jnp.array([[False] * SEQ,
                          [False] * (SEQ - 2) + [True] * 2])   # tgt_key_padding_mask
    tgt = jax.random.randint(k_tok, (BATCH, SEQ), 1, VOCAB, dtype=jnp.int32)
    tgt = jnp.where(mask_out, PADDING_TOKEN, tgt)              # pad tokens
    memory = jax.random.normal(k_mem, (BATCH, MEM_SEQ, D_MODEL), jnp.float32)

    logits = transformer_decoder_forward(tgt, memory, mask_out, params, N_HEADS)
    jax.block_until_ready(logits)

    ref = _ref_forward(tgt, memory, mask_out, params, N_HEADS)
    assert logits.shape == (BATCH, SEQ, VOCAB)
    assert bool(jnp.all(jnp.isfinite(logits)))
    assert jnp.allclose(logits, ref, atol=2e-2, rtol=2e-2), (
        "max |diff| = %f" % float(jnp.max(jnp.abs(logits - ref))))

    print("KERNEL_OK")
</pallas_src>

<mosaic_0001>
module attributes {stable_mosaic.version = 11 : i64} {
  func.func @_embed_pe_kernel(%arg0: memref<16x1xi32, #tpu.memory_space<vmem>>, %arg1: memref<32x32xf32, #tpu.memory_space<vmem>>, %arg2: memref<16x32xf32, #tpu.memory_space<vmem>>, %arg3: memref<16x32xf32, #tpu.memory_space<vmem>>) attributes {dimension_semantics = [], scalar_prefetch = 0 : i64, scratch_operands = 0 : i64, tpu.core_type = #tpu.core_type<tc>} {
    %c0 = arith.constant 0 : index
    %c0_0 = arith.constant 0 : index
    %0 = vector.load %arg0[%c0, %c0_0] : memref<16x1xi32, #tpu.memory_space<vmem>>, vector<16x1xi32>
    %1 = tpu.iota {dimensions = array<i32: 1>} : vector<16x32xi32>
    %2 = vector.broadcast %0 : vector<16x1xi32> to vector<16x32xi32>
    %3 = arith.cmpi eq, %1, %2 : vector<16x32xi32>
    %4 = arith.extui %3 : vector<16x32xi1> to vector<16x32xi32>
    %5 = arith.sitofp %4 : vector<16x32xi32> to vector<16x32xf32>
    %c0_1 = arith.constant 0 : index
    %c0_2 = arith.constant 0 : index
    %6 = vector.load %arg1[%c0_1, %c0_2] : memref<32x32xf32, #tpu.memory_space<vmem>>, vector<32x32xf32>
    %cst = arith.constant dense<0.000000e+00> : vector<16x32xf32>
    %7 = tpu.matmul %5, %6, %cst {dimension_numbers = #tpu.dot_dimension_numbers<[1], [0], [0], [1], [0, 0, 1, 1], [], []>} : vector<16x32xf32>, vector<32x32xf32>, vector<16x32xf32> -> vector<16x32xf32>
    %c0_3 = arith.constant 0 : index
    %c0_4 = arith.constant 0 : index
    %8 = vector.load %arg2[%c0_3, %c0_4] : memref<16x32xf32, #tpu.memory_space<vmem>>, vector<16x32xf32>
    %9 = arith.addf %7, %8 : vector<16x32xf32>
    %c0_5 = arith.constant 0 : index
    %c0_6 = arith.constant 0 : index
    %10 = vector.load %arg3[%c0_5, %c0_6] : memref<16x32xf32, #tpu.memory_space<vmem>>, vector<16x32xf32>
    tpu.vector_store %arg3[%c0_5, %c0_6], %9 {strides = array<i32>} : memref<16x32xf32, #tpu.memory_space<vmem>>, vector<16x32xf32>,
    return
  }
}

</mosaic_0001>

<llo_original>
// kernel: tpu_custom_call.1
$region0: #{tpu_custom_call.1}
  #allocation0 [shape = 'u32[]', space=smem, size = 0x4, offset = 0x4, fixed_abs, tag = 'smem constant byte address 0x4 - core index']
  #allocation1 [shape = 'u32[144,128]{1,0:T(1,128)}', space=vmem, size = 0x12000, scoped, tag = 'internal scratch']
  %s0 = inlined_call_operand.vmem [shape: s32[16,1], index: 0, kind: input, shape index: {}]
  %s1 = inlined_call_operand.hbm [shape: f32[32,32], index: 1, kind: input, shape index: {}]
  %s2 = inlined_call_operand.vmem [shape: f32[16,32], index: 2, kind: input, shape index: {}]
  %s3 = inlined_call_operand.hbm [shape: f32[16,32], index: 3, kind: output, shape index: {}]
  %s4 = sld [smem:[#allocation0]]
  $region26: #{tpu_custom_call.1} parent=0
    _
  %s6 = ssub.s32 1, %s4
  %s7 = scalar_select 0, %s6, %s4
  $region1: #{tpu_custom_call.1} parent=0
    #allocation2 [shape = 'u8[16384]{0}', space=vmem, size = 0x4000, scoped, tag = 'input window, operand 1, single buffered']
    #allocation3 [shape = 's32[1]{0}', space=sflag, size = 0x4, scoped, tag = 'scoped memory for tpu_custom_call.1']
    #allocation4 [shape = 's32[1]{0}', space=sflag, size = 0x4, scoped, tag = 'scoped memory for tpu_custom_call.1']
    #allocation5 [shape = 'u8[8192]{0}', space=vmem, size = 0x2000, scoped, tag = 'output window, operand 0, single buffered']
    %8 = vsyncpa [#allocation3], 0
    %9 = vsyncpa [#allocation4], 0
    // Predicated region
    $region2: #{tpu_custom_call.1} parent=1 // pred_check
      _
    $region3: #{tpu_custom_call.1} parent=1 // pred_check_branch
      %11 = sbr.rel (0) target = $region5
    $region4: #{tpu_custom_call.1} parent=1 // pred_region
      _
    $region5: #{tpu_custom_call.1} parent=1 // pred_fallthru
      _
    // Predicated region
    $region6: #{tpu_custom_call.1} parent=1 // pred_check
      _
    $region7: #{tpu_custom_call.1} parent=1 // pred_check_branch
      %13 = sbr.rel (0) target = $region9
    $region8: #{tpu_custom_call.1} parent=1 // pred_region
      %s15 = ssub.s32 512, 512
      %16 = vsyncadd [#allocation3], %s15
      %s17 = sshll.u32 [#allocation2], 4
      %s18 = int_to_ptr.vmem [resolvable:$true] %s17
      %23 = dma.hbm_to_vmem [thread:$0]  %s1, 512, %s18, [#allocation3], 128, 128, 8
    $region9: #{tpu_custom_call.1} parent=1 // pred_fallthru
      _
    // Predicated region
    $region10: #{tpu_custom_call.1} parent=1 // pred_check
      _
    $region11: #{tpu_custom_call.1} parent=1 // pred_check_branch
      %25 = sbr.rel (0) target = $region13
    $region12: #{tpu_custom_call.1} parent=1 // pred_region
      _
    $region13: #{tpu_custom_call.1} parent=1 // pred_fallthru
      _
    // Predicated region
    $region14: #{tpu_custom_call.1} parent=1 // pred_check
      _
    $region15: #{tpu_custom_call.1} parent=1 // pred_check_branch
      %27 = sbr.rel (0) target = $region17
    $region16: #{tpu_custom_call.1} parent=1 // pred_region
      %28 = dma.done [#allocation3], 512
    $region17: #{tpu_custom_call.1} parent=1 // pred_fallthru
      _
    %v29 = vld [vmem:[%s0] sm:$0xff]
    %v30 = vld [vmem:[%s0 + $0x8] sm:$0xff]
    %v31 = vlaneseq
    %v32 = vand.u32 %v31, 127
    %33 = vset.pattern.permute.xlu0 0
    %34 = vperm.xlu0 %33, %v29
    %v35 = vpop.permute.xlu0 %34
    %36 = vset.pattern.permute.xlu0 0
    %37 = vperm.xlu0 %36, %v30
    %v38 = vpop.permute.xlu0 %37
    %vm39 = vcmp.eq.s32.totalorder %v32, %v35
    %vm40 = vcmp.eq.s32.totalorder %v32, %v38
    %v41 = vsel %vm39, 1, 0
    %v42 = vsel %vm40, 1, 0
    %v43 = vcvt.s32.f32 %v41
    %v44 = vcvt.s32.f32 %v42
    %v45 = vld [vmem:[#allocation2] sm:$0xff]
    %v46 = vld [vmem:[#allocation2 + $0x8] sm:$0xff]
    %v47 = vld [vmem:[#allocation2 + $0x10] sm:$0xff]
    %v48 = vld [vmem:[#allocation2 + $0x18] sm:$0xff]
    %v49 = vld [vmem:[%s2] sm:$0xff]
    %v50 = vld [vmem:[%s2 + $0x8] sm:$0xff]
    %vm51 = vcmask 261120
    %v53 = vsel %vm51, %v43, 0
    %v56 = vsel %vm51, %v44, 0
    %58 = vmatprep.subr.mxu0 0.0
    %59 = vmatpush1.msra.mxu0 %v45
    %60 = vmatprep.subr.mxu0 0.0
    %61 = vmatpush1.msra.mxu0 %v46
    %62 = vmatprep.subr.mxu0 0.0
    %63 = vmatpush1.msra.mxu0 %v47
    %64 = vmatprep.subr.mxu0 0.0
    %65 = vmatpush1.msra.mxu0 %v48
    %66 = vmatprep.subr.mxu0 0.0
    %67 = vmatpush1.msra.mxu0 0.0
    %68 = vmatprep.subr.mxu0 0.0
    %69 = vmatpush1.msra.mxu0 0.0
    %70 = vmatprep.subr.mxu0 0.0
    %71 = vmatpush1.msra.mxu0 0.0
    %72 = vmatprep.subr.mxu0 0.0
    %73 = vmatpush1.msra.mxu0 0.0
    %74 = vmatprep.subr.mxu0 0.0
    %75 = vmatpush1.msra.mxu0 0.0
    %76 = vmatprep.subr.mxu0 0.0
    %77 = vmatpush1.msra.mxu0 0.0
    %78 = vmatprep.subr.mxu0 0.0
    %79 = vmatpush1.msra.mxu0 0.0
    %80 = vmatprep.subr.mxu0 0.0
    %81 = vmatpush1.msra.mxu0 0.0
    %82 = vmatprep.subr.mxu0 0.0
    %83 = vmatpush1.msra.mxu0 0.0
    %84 = vmatprep.subr.mxu0 0.0
    %85 = vmatpush1.msra.mxu0 0.0
    %86 = vmatprep.subr.mxu0 0.0
    %87 = vmatpush1.msra.mxu0 0.0
    %88 = vmatprep.subr.mxu0 0.0
    %89 = vmatpush1.msra.mxu0 0.0
    %90 = vmatprep.subr.mxu0 0.0
    %91 = vmatpush1.msra.mxu0 0.0
    %92 = vmatprep.subr.mxu0 0.0
    %93 = vmatpush1.msra.mxu0 0.0
    %94 = vmatprep.subr.mxu0 0.0
    %95 = vmatpush1.msra.mxu0 0.0
    %96 = vmatprep.subr.mxu0 0.0
    %97 = vmatpush1.msra.mxu0 0.0
    %98 = vmatprep.subr.mxu0 0.0
    %99 = vmatpush1.msra.mxu0 0.0
    %100 = vmatprep.subr.mxu0 0.0
    %101 = vmatpush1.msra.mxu0 0.0
    %102 = vmatprep.subr.mxu0 0.0
    %103 = vmatpush1.msra.mxu0 0.0
    %104 = vmatprep.subr.mxu0 0.0
    %105 = vmatpush1.msra.mxu0 0.0
    %106 = vmatprep.subr.mxu0 0.0
    %107 = vmatpush1.msra.mxu0 0.0
    %108 = vmatprep.subr.mxu0 0.0
    %109 = vmatpush1.msra.mxu0 0.0
    %110 = vmatprep.subr.mxu0 0.0
    %111 = vmatpush1.msra.mxu0 0.0
    %112 = vmatprep.subr.mxu0 0.0
    %113 = vmatpush1.msra.mxu0 0.0
    %114 = vmatprep.subr.mxu0 0.0
    %115 = vmatpush1.msra.mxu0 0.0
    %116 = vmatprep.subr.mxu0 0.0
    %117 = vmatpush1.msra.mxu0 0.0
    %118 = vmatprep.subr.mxu0 0.0
    %119 = vmatpush1.msra.mxu0 0.0
    %120 = vmatprep.subr.mxu0 0.0
    %121 = vmatpush1.msra.mxu0 0.0
    %122 = vmatprep.mubr.f32.mxu0 0.0
    %123 = vmatmul.mubr.f32.gmra.mrb[0].mxu0 %v53
    %v124 = vpop.f32.mrb[0].mxu0
    %v125 = vadd.f32 %v49, %v124
    %v126 = vpop.f32.mrb[0].mxu0
    %127 = vmatprep.mubr.f32.mxu0 0.0
    %128 = vmatmul.mubr.f32.gmra.mrb[0].mxu0 %v56
    %v129 = vpop.f32.mrb[0].mxu0
    %v130 = vadd.f32 %v50, %v129
    %v131 = vpop.f32.mrb[0].mxu0
    %132 = vdwg.mxu0
    %133 = vst.msk [vmem:[#allocation5] sm:$0xff] %vm51, %v125
    %134 = vst.msk [vmem:[#allocation5 + $0x8] sm:$0xff] %vm51, %v130
    // Predicated region
    $region18: #{tpu_custom_call.1} parent=1 // pred_check
      _
    $region19: #{tpu_custom_call.1} parent=1 // pred_check_branch
      %136 = sbr.rel (0) target = $region21
    $region20: #{tpu_custom_call.1} parent=1 // pred_region
      %s138 = ssub.s32 256, 256
      %139 = vsyncadd [#allocation4], %s138
      %s140 = sshll.u32 [#allocation5], 4
      %s141 = int_to_ptr.vmem [resolvable:$true] %s140
      %146 = dma.vmem_to_hbm [thread:$0]  %s141, 256, %s3, [#allocation4], 128, 128, 8
    $region21: #{tpu_custom_call.1} parent=1 // pred_fallthru
      _
    // Predicated region
    $region22: #{tpu_custom_call.1} parent=1 // pred_check
      _
    $region23: #{tpu_custom_call.1} parent=1 // pred_check_branch
      %148 = sbr.rel (0) target = $region25
    $region24: #{tpu_custom_call.1} parent=1 // pred_region
      %149 = dma.done [#allocation4], 256
    $region25: #{tpu_custom_call.1} parent=1 // pred_fallthru
      _
    %150 = vsyncpa [#allocation3], 1
    %151 = vsyncpa [#allocation4], 1

</llo_original>
